<compile_context>
chip_gen: v7x
topology: tpu7x:2x2x1
jax: 0.10.0
libtpu: 0.0.40
codegen_flags: <defaults>
</compile_context>

<pallas_src>
import functools

import jax
import jax.numpy as jnp
from jax.experimental import pallas as pl
from jax.experimental.pallas import tpu as pltpu

TILE_B = 128  # batch tile for the large-batch path (multiple of 8)


def _fused_value_kernel(*refs, n_hidden):
    """refs = (x, w0, b0, ..., w_{n-1}, b_{n-1}, w_head, b_head, out)."""
    x_ref = refs[0]
    o_ref = refs[-1]
    p_refs = refs[1:-1]

    h = x_ref[...].astype(jnp.float32)
    # Hidden layers: MXU matmul + bias + relu, all in-register.
    for i in range(n_hidden):
        w = p_refs[2 * i][...]
        b = p_refs[2 * i + 1][...]
        h = jnp.dot(h, w, preferred_element_type=jnp.float32) + b
        h = jnp.maximum(h, 0.0)

    # Head (fan_out == 1): VPU multiply + lane reduction, no N=1 MXU pass.
    w_head = p_refs[2 * n_hidden][...]      # (1, hidden[-1])
    b_head = p_refs[2 * n_hidden + 1][...]  # (1, 1)
    out = jnp.sum(h * w_head, axis=-1, keepdims=True) + b_head
    o_ref[...] = out.astype(o_ref.dtype)


def value_forward(x, params, head, *, tile_b=TILE_B):
    """Fused forward pass of the value MLP inside one Pallas kernel."""
    B, Din = x.shape
    n_hidden = len(params)

    flat_params = []
    for (w, b) in params:
        flat_params += [w, b]
    flat_params += [head[0], head[1]]

    kernel = functools.partial(_fused_value_kernel, n_hidden=n_hidden)

    if B < tile_b:
        # Small batch: single fused gridless call, everything as full-array
        # VMEM blocks (no grid prologue/epilogue, no double buffering).
        return pl.pallas_call(
            kernel,
            out_shape=jax.ShapeDtypeStruct((B, 1), x.dtype),
        )(x, *flat_params)

    # Large-batch path: tile the batch axis only.  Pad to a multiple of the
    # tile so VMEM use stays bounded for arbitrary batch sizes.
    B_pad = pl.cdiv(B, tile_b) * tile_b
    x_in = x if B_pad == B else jnp.pad(x, ((0, B_pad - B), (0, 0)))

    in_specs = [pl.BlockSpec((tile_b, Din), lambda i: (i, 0))]
    for p in flat_params:
        r, c = p.shape
        # Constant index_map -> block index never changes -> weights are
        # DMA'd once and stay VMEM-resident across grid steps.
        in_specs.append(pl.BlockSpec((r, c), lambda i: (0, 0)))

    out = pl.pallas_call(
        kernel,
        out_shape=jax.ShapeDtypeStruct((B_pad, 1), x.dtype),
        grid=(B_pad // tile_b,),
        in_specs=in_specs,
        out_specs=pl.BlockSpec((tile_b, 1), lambda i: (i, 0)),
        compiler_params=pltpu.CompilerParams(
            dimension_semantics=("parallel",),  # shards across v7x's 2 TCs
        ),
    )(x_in, *flat_params)

    return out if B_pad == B else out[:B]


def init_value_params(key, env_infos, hidden):
    """Deterministic init mirroring nn.Linear default (uniform +-1/sqrt(fan_in)).

    Hidden weights stored transposed: (in_features, out_features).
    Head weight stored as (1, hidden[-1]) for the VPU-reduction head.
    """
    params = []
    dims = [env_infos[0]] + list(hidden)
    for i in range(len(hidden)):
        fan_in, fan_out = dims[i], dims[i + 1]
        key, kw, kb = jax.random.split(key, 3)
        bound = 1.0 / jnp.sqrt(fan_in)
        w = jax.random.uniform(kw, (fan_in, fan_out), jnp.float32, -bound, bound)
        b = jax.random.uniform(kb, (1, fan_out), jnp.float32, -bound, bound)
        params.append((w, b))
    # head: hidden[-1] -> 1, stored as (1, hidden[-1])
    fan_in = hidden[-1]
    key, kw, kb = jax.random.split(key, 3)
    bound = 1.0 / jnp.sqrt(fan_in)
    w = jax.random.uniform(kw, (1, fan_in), jnp.float32, -bound, bound)
    b = jax.random.uniform(kb, (1, 1), jnp.float32, -bound, bound)
    return params, (w, b)


def _reference_forward(x, params, head):
    ref = x
    for (w, b) in params:
        ref = jnp.maximum(ref @ w + b, 0.0)
    return jnp.sum(ref * head[0], axis=-1, keepdims=True) + head[1]


if __name__ == "__main__":
    # Shapes consistent with the module:
    #   env_infos[0] = 16 observation features, hidden = [32, 32]
    env_infos = [16]
    hidden = [32, 32]

    key = jax.random.PRNGKey(0)
    params, head = init_value_params(key, env_infos, hidden)

    # --- small batch (gridless fused path) ---
    batch = 8
    key, kx = jax.random.split(key)
    x = jax.random.normal(kx, (batch, env_infos[0]), jnp.float32)

    out = jax.block_until_ready(value_forward(x, params, head))
    ref = _reference_forward(x, params, head)
    assert out.shape == (batch, 1)
    assert jnp.allclose(out, ref, atol=1e-5, rtol=1e-5)

    # --- larger batch (batch-tiled fused path, weights VMEM-resident) ---
    big_batch = 256
    key, kx2 = jax.random.split(key)
    x_big = jax.random.normal(kx2, (big_batch, env_infos[0]), jnp.float32)

    out_big = jax.block_until_ready(value_forward(x_big, params, head))
    ref_big = _reference_forward(x_big, params, head)
    assert out_big.shape == (big_batch, 1)
    assert jnp.allclose(out_big, ref_big, atol=1e-5, rtol=1e-5)

    # --- large batch that is NOT a multiple of the tile (padded path) ---
    odd_batch = 200
    key, kx3 = jax.random.split(key)
    x_odd = jax.random.normal(kx3, (odd_batch, env_infos[0]), jnp.float32)

    out_odd = jax.block_until_ready(value_forward(x_odd, params, head))
    ref_odd = _reference_forward(x_odd, params, head)
    assert out_odd.shape == (odd_batch, 1)
    assert jnp.allclose(out_odd, ref_odd, atol=1e-5, rtol=1e-5)

    print("KERNEL_OK")
</pallas_src>

<mosaic_0001>
module attributes {stable_mosaic.version = 11 : i64} {
  func.func @_fused_value_kernel(%arg0: memref<8x16xf32, #tpu.memory_space<vmem>>, %arg1: memref<16x32xf32, #tpu.memory_space<vmem>>, %arg2: memref<1x32xf32, #tpu.memory_space<vmem>>, %arg3: memref<32x32xf32, #tpu.memory_space<vmem>>, %arg4: memref<1x32xf32, #tpu.memory_space<vmem>>, %arg5: memref<1x32xf32, #tpu.memory_space<vmem>>, %arg6: memref<1x1xf32, #tpu.memory_space<vmem>>, %arg7: memref<8x1xf32, #tpu.memory_space<vmem>>) attributes {dimension_semantics = [], scalar_prefetch = 0 : i64, scratch_operands = 0 : i64, tpu.core_type = #tpu.core_type<tc>} {
    %c0 = arith.constant 0 : index
    %c0_0 = arith.constant 0 : index
    %0 = vector.load %arg0[%c0, %c0_0] : memref<8x16xf32, #tpu.memory_space<vmem>>, vector<8x16xf32>
    %c0_1 = arith.constant 0 : index
    %c0_2 = arith.constant 0 : index
    %1 = vector.load %arg1[%c0_1, %c0_2] : memref<16x32xf32, #tpu.memory_space<vmem>>, vector<16x32xf32>
    %c0_3 = arith.constant 0 : index
    %c0_4 = arith.constant 0 : index
    %2 = vector.load %arg2[%c0_3, %c0_4] : memref<1x32xf32, #tpu.memory_space<vmem>>, vector<1x32xf32>
    %cst = arith.constant dense<0.000000e+00> : vector<8x32xf32>
    %3 = tpu.matmul %0, %1, %cst {dimension_numbers = #tpu.dot_dimension_numbers<[1], [0], [0], [1], [0, 0, 1, 1], [], []>} : vector<8x16xf32>, vector<16x32xf32>, vector<8x32xf32> -> vector<8x32xf32>
    %4 = vector.broadcast %2 : vector<1x32xf32> to vector<8x32xf32>
    %5 = arith.addf %3, %4 : vector<8x32xf32>
    %cst_5 = arith.constant 0.000000e+00 : f32
    %6 = vector.broadcast %cst_5 : f32 to vector<8x32xf32>
    %7 = arith.maximumf %5, %6 : vector<8x32xf32>
    %c0_6 = arith.constant 0 : index
    %c0_7 = arith.constant 0 : index
    %8 = vector.load %arg3[%c0_6, %c0_7] : memref<32x32xf32, #tpu.memory_space<vmem>>, vector<32x32xf32>
    %c0_8 = arith.constant 0 : index
    %c0_9 = arith.constant 0 : index
    %9 = vector.load %arg4[%c0_8, %c0_9] : memref<1x32xf32, #tpu.memory_space<vmem>>, vector<1x32xf32>
    %cst_10 = arith.constant dense<0.000000e+00> : vector<8x32xf32>
    %10 = tpu.matmul %7, %8, %cst_10 {dimension_numbers = #tpu.dot_dimension_numbers<[1], [0], [0], [1], [0, 0, 1, 1], [], []>} : vector<8x32xf32>, vector<32x32xf32>, vector<8x32xf32> -> vector<8x32xf32>
    %11 = vector.broadcast %9 : vector<1x32xf32> to vector<8x32xf32>
    %12 = arith.addf %10, %11 : vector<8x32xf32>
    %cst_11 = arith.constant 0.000000e+00 : f32
    %13 = vector.broadcast %cst_11 : f32 to vector<8x32xf32>
    %14 = arith.maximumf %12, %13 : vector<8x32xf32>
    %c0_12 = arith.constant 0 : index
    %c0_13 = arith.constant 0 : index
    %15 = vector.load %arg5[%c0_12, %c0_13] : memref<1x32xf32, #tpu.memory_space<vmem>>, vector<1x32xf32>
    %c0_14 = arith.constant 0 : index
    %c0_15 = arith.constant 0 : index
    %16 = vector.load %arg6[%c0_14, %c0_15] : memref<1x1xf32, #tpu.memory_space<vmem>>, vector<1x1xf32>
    %17 = vector.broadcast %15 : vector<1x32xf32> to vector<8x32xf32>
    %18 = arith.mulf %14, %17 : vector<8x32xf32>
    %cst_16 = arith.constant dense<0.000000e+00> : vector<8xf32>
    %19 = vector.multi_reduction <add>, %18, %cst_16 [1] : vector<8x32xf32> to vector<8xf32>
    %20 = vector.shape_cast %19 : vector<8xf32> to vector<8x1xf32>
    %21 = vector.broadcast %16 : vector<1x1xf32> to vector<8x1xf32>
    %22 = arith.addf %20, %21 : vector<8x1xf32>
    %c0_17 = arith.constant 0 : index
    %c0_18 = arith.constant 0 : index
    %23 = vector.load %arg7[%c0_17, %c0_18] : memref<8x1xf32, #tpu.memory_space<vmem>>, vector<8x1xf32>
    tpu.vector_store %arg7[%c0_17, %c0_18], %22 {strides = array<i32>} : memref<8x1xf32, #tpu.memory_space<vmem>>, vector<8x1xf32>,
    return
  }
}

</mosaic_0001>

<llo_original>
// kernel: tpu_custom_call.1
$region0: #{tpu_custom_call.1}
  #allocation0 [shape = 'u32[]', space=smem, size = 0x4, offset = 0x4, fixed_abs, tag = 'smem constant byte address 0x4 - core index']
  #allocation1 [shape = 'u32[144,128]{1,0:T(1,128)}', space=vmem, size = 0x12000, scoped, tag = 'internal scratch']
  #allocation2 [shape = 'f32[1,1]{1,0:T(1,128)S(1)}', space=vmem, size = 0x200, scoped, tag = 'scoped memory for tpu_custom_call.1']
  %s0 = inlined_call_operand.hbm [shape: f32[8,16], index: 0, kind: input, shape index: {}]
  %s1 = inlined_call_operand.hbm [shape: f32[16,32], index: 1, kind: input, shape index: {}]
  %s2 = inlined_call_operand.vmem [shape: f32[1,32], index: 2, kind: input, shape index: {}]
  %s3 = inlined_call_operand.hbm [shape: f32[32,32], index: 3, kind: input, shape index: {}]
  %s4 = inlined_call_operand.vmem [shape: f32[1,32], index: 4, kind: input, shape index: {}]
  %s5 = inlined_call_operand.vmem [shape: f32[1,32], index: 5, kind: input, shape index: {}]
  %s6 = inlined_call_operand.<no memory space> [shape: f32[1,1], index: 6, kind: input, shape index: {}]
  %s7 = inlined_call_operand.vmem [shape: f32[8,1], index: 7, kind: output, shape index: {}]
  %s8 = sld [smem:[#allocation0]]
  $region50: #{tpu_custom_call.1} parent=0
    _
  %s10 = ssub.s32 1, %s8
  %s11 = scalar_select 0, %s10, %s8
  %v12 = vstv %s6
  %13 = vst [vmem:[#allocation2] sm:$0x1] %v12
  $region1: #{tpu_custom_call.1} parent=0
    #allocation3 [shape = 'u8[4096]{0}', space=vmem, size = 0x1000, scoped, tag = 'input window, operand 0, single buffered']
    #allocation4 [shape = 's32[1]{0}', space=sflag, size = 0x4, scoped, tag = 'scoped memory for tpu_custom_call.1']
    #allocation5 [shape = 'u8[8192]{0}', space=vmem, size = 0x2000, scoped, tag = 'input window, operand 1, single buffered']
    #allocation6 [shape = 's32[1]{0}', space=sflag, size = 0x4, scoped, tag = 'scoped memory for tpu_custom_call.1']
    #allocation7 [shape = 'u8[16384]{0}', space=vmem, size = 0x4000, scoped, tag = 'input window, operand 3, single buffered']
    %14 = vsyncpa [#allocation4], 0
    %15 = vsyncpa [#allocation6], 0
    // Predicated region
    $region2: #{tpu_custom_call.1} parent=1 // pred_check
      _
    $region3: #{tpu_custom_call.1} parent=1 // pred_check_branch
      %17 = sbr.rel (0) target = $region5
    $region4: #{tpu_custom_call.1} parent=1 // pred_region
      %s19 = ssub.s32 128, 128
      %20 = vsyncadd [#allocation4], %s19
      %s22 = sshll.u32 [#allocation3], 4
      %s23 = int_to_ptr.vmem [resolvable:$true] %s22
      %25 = dma.hbm_to_vmem [thread:$0]  %s0, 128, %s23, [#allocation4]
    $region5: #{tpu_custom_call.1} parent=1 // pred_fallthru
      _
    // Predicated region
    $region6: #{tpu_custom_call.1} parent=1 // pred_check
      _
    $region7: #{tpu_custom_call.1} parent=1 // pred_check_branch
      %27 = sbr.rel (0) target = $region9
    $region8: #{tpu_custom_call.1} parent=1 // pred_region
      %s29 = ssub.s32 256, 256
      %30 = vsyncadd [#allocation6], %s29
      %s31 = sshll.u32 [#allocation5], 4
      %s32 = int_to_ptr.vmem [resolvable:$true] %s31
      %37 = dma.hbm_to_vmem [thread:$0]  %s1, 256, %s32, [#allocation6], 128, 128, 8
    $region9: #{tpu_custom_call.1} parent=1 // pred_fallthru
      _
    // Predicated region
    $region10: #{tpu_custom_call.1} parent=1 // pred_check
      _
    $region11: #{tpu_custom_call.1} parent=1 // pred_check_branch
      %39 = sbr.rel (0) target = $region13
    $region12: #{tpu_custom_call.1} parent=1 // pred_region
      _
    $region13: #{tpu_custom_call.1} parent=1 // pred_fallthru
      _
    // Predicated region
    $region14: #{tpu_custom_call.1} parent=1 // pred_check
      _
    $region15: #{tpu_custom_call.1} parent=1 // pred_check_branch
      %41 = sbr.rel (0) target = $region17
    $region16: #{tpu_custom_call.1} parent=1 // pred_region
      %s43 = ssub.s32 512, 512
      %44 = vsyncadd [#allocation6], %s43
      %s45 = sshll.u32 [#allocation7], 4
      %s46 = int_to_ptr.vmem [resolvable:$true] %s45
      %51 = dma.hbm_to_vmem [thread:$0]  %s3, 512, %s46, [#allocation6], 128, 128, 8
    $region17: #{tpu_custom_call.1} parent=1 // pred_fallthru
      _
    // Predicated region
    $region18: #{tpu_custom_call.1} parent=1 // pred_check
      _
    $region19: #{tpu_custom_call.1} parent=1 // pred_check_branch
      %53 = sbr.rel (0) target = $region21
    $region20: #{tpu_custom_call.1} parent=1 // pred_region
      _
    $region21: #{tpu_custom_call.1} parent=1 // pred_fallthru
      _
    // Predicated region
    $region22: #{tpu_custom_call.1} parent=1 // pred_check
      _
    $region23: #{tpu_custom_call.1} parent=1 // pred_check_branch
      %55 = sbr.rel (0) target = $region25
    $region24: #{tpu_custom_call.1} parent=1 // pred_region
      _
    $region25: #{tpu_custom_call.1} parent=1 // pred_fallthru
      _
    // Predicated region
    $region26: #{tpu_custom_call.1} parent=1 // pred_check
      _
    $region27: #{tpu_custom_call.1} parent=1 // pred_check_branch
      %57 = sbr.rel (0) target = $region29
    $region28: #{tpu_custom_call.1} parent=1 // pred_region
      _
    $region29: #{tpu_custom_call.1} parent=1 // pred_fallthru
      _
    // Predicated region
    $region30: #{tpu_custom_call.1} parent=1 // pred_check
      _
    $region31: #{tpu_custom_call.1} parent=1 // pred_check_branch
      %59 = sbr.rel (0) target = $region33
    $region32: #{tpu_custom_call.1} parent=1 // pred_region
      %60 = dma.done [#allocation4], 128
    $region33: #{tpu_custom_call.1} parent=1 // pred_fallthru
      _
    // Predicated region
    $region34: #{tpu_custom_call.1} parent=1 // pred_check
      _
    $region35: #{tpu_custom_call.1} parent=1 // pred_check_branch
      %62 = sbr.rel (0) target = $region37
    $region36: #{tpu_custom_call.1} parent=1 // pred_region
      %63 = dma.done [#allocation6], 256
    $region37: #{tpu_custom_call.1} parent=1 // pred_fallthru
      _
    // Predicated region
    $region38: #{tpu_custom_call.1} parent=1 // pred_check
      _
    $region39: #{tpu_custom_call.1} parent=1 // pred_check_branch
      %65 = sbr.rel (0) target = $region41
    $region40: #{tpu_custom_call.1} parent=1 // pred_region
      %66 = dma.done [#allocation6], 512
    $region41: #{tpu_custom_call.1} parent=1 // pred_fallthru
      _
    %v67 = vld [vmem:[#allocation3] sm:$0xff]
    %v68 = vld [vmem:[#allocation5] sm:$0xff]
    %v69 = vld [vmem:[#allocation5 + $0x8] sm:$0xff]
    %v70 = vld [vmem:[%s2] sm:$0x1]
    %v72 = vlaneseq
    %v73 = vshrl.u32 %v72, 7
    %v74 = vsub.s32 0, %v73
    %v75 = vrot.slane %v70, %v74
    %vm77 = vcmask 130048
    %v79 = vsel %vm77, %v67, 0
    %81 = vmatprep.subr.mxu0 0.0
    %82 = vmatpush1.msra.mxu0 %v68
    %83 = vmatprep.subr.mxu0 0.0
    %84 = vmatpush1.msra.mxu0 %v69
    %85 = vmatprep.subr.mxu0 0.0
    %86 = vmatpush1.msra.mxu0 0.0
    %87 = vmatprep.subr.mxu0 0.0
    %88 = vmatpush1.msra.mxu0 0.0
    %89 = vmatprep.subr.mxu0 0.0
    %90 = vmatpush1.msra.mxu0 0.0
    %91 = vmatprep.subr.mxu0 0.0
    %92 = vmatpush1.msra.mxu0 0.0
    %93 = vmatprep.subr.mxu0 0.0
    %94 = vmatpush1.msra.mxu0 0.0
    %95 = vmatprep.subr.mxu0 0.0
    %96 = vmatpush1.msra.mxu0 0.0
    %97 = vmatprep.subr.mxu0 0.0
    %98 = vmatpush1.msra.mxu0 0.0
    %99 = vmatprep.subr.mxu0 0.0
    %100 = vmatpush1.msra.mxu0 0.0
    %101 = vmatprep.subr.mxu0 0.0
    %102 = vmatpush1.msra.mxu0 0.0
    %103 = vmatprep.subr.mxu0 0.0
    %104 = vmatpush1.msra.mxu0 0.0
    %105 = vmatprep.subr.mxu0 0.0
    %106 = vmatpush1.msra.mxu0 0.0
    %107 = vmatprep.subr.mxu0 0.0
    %108 = vmatpush1.msra.mxu0 0.0
    %109 = vmatprep.subr.mxu0 0.0
    %110 = vmatpush1.msra.mxu0 0.0
    %111 = vmatprep.subr.mxu0 0.0
    %112 = vmatpush1.msra.mxu0 0.0
    %113 = vmatprep.subr.mxu0 0.0
    %114 = vmatpush1.msra.mxu0 0.0
    %115 = vmatprep.subr.mxu0 0.0
    %116 = vmatpush1.msra.mxu0 0.0
    %117 = vmatprep.subr.mxu0 0.0
    %118 = vmatpush1.msra.mxu0 0.0
    %119 = vmatprep.subr.mxu0 0.0
    %120 = vmatpush1.msra.mxu0 0.0
    %121 = vmatprep.subr.mxu0 0.0
    %122 = vmatpush1.msra.mxu0 0.0
    %123 = vmatprep.subr.mxu0 0.0
    %124 = vmatpush1.msra.mxu0 0.0
    %125 = vmatprep.subr.mxu0 0.0
    %126 = vmatpush1.msra.mxu0 0.0
    %127 = vmatprep.subr.mxu0 0.0
    %128 = vmatpush1.msra.mxu0 0.0
    %129 = vmatprep.subr.mxu0 0.0
    %130 = vmatpush1.msra.mxu0 0.0
    %131 = vmatprep.subr.mxu0 0.0
    %132 = vmatpush1.msra.mxu0 0.0
    %133 = vmatprep.subr.mxu0 0.0
    %134 = vmatpush1.msra.mxu0 0.0
    %135 = vmatprep.subr.mxu0 0.0
    %136 = vmatpush1.msra.mxu0 0.0
    %137 = vmatprep.subr.mxu0 0.0
    %138 = vmatpush1.msra.mxu0 0.0
    %139 = vmatprep.subr.mxu0 0.0
    %140 = vmatpush1.msra.mxu0 0.0
    %141 = vmatprep.subr.mxu0 0.0
    %142 = vmatpush1.msra.mxu0 0.0
    %143 = vmatprep.subr.mxu0 0.0
    %144 = vmatpush1.msra.mxu0 0.0
    %145 = vmatprep.mubr.f32.mxu0 0.0
    %146 = vmatmul.mubr.f32.gmra.mrb[0].mxu0 %v79
    %v147 = vpop.f32.mrb[0].mxu0
    %v148 = vadd.f32 %v75, %v147
    %v149 = vpop.f32.mrb[0].mxu0
    %150 = vdwg.mxu0
    %v151 = vmax.f32 %v148, 0.0
    %v152 = vld [vmem:[#allocation7] sm:$0xff]
    %v153 = vld [vmem:[#allocation7 + $0x8] sm:$0xff]
    %v154 = vld [vmem:[#allocation7 + $0x10] sm:$0xff]
    %v155 = vld [vmem:[#allocation7 + $0x18] sm:$0xff]
    %v156 = vld [vmem:[%s4] sm:$0x1]
    %v158 = vlaneseq
    %v159 = vshrl.u32 %v158, 7
    %v160 = vsub.s32 0, %v159
    %v161 = vrot.slane %v156, %v160
    %vm163 = vcmask 261120
    %v165 = vsel %vm163, %v151, 0
    %167 = vmatprep.subr.mxu0 0.0
    %168 = vmatpush1.msra.mxu0 %v152
    %169 = vmatprep.subr.mxu0 0.0
    %170 = vmatpush1.msra.mxu0 %v153
    %171 = vmatprep.subr.mxu0 0.0
    %172 = vmatpush1.msra.mxu0 %v154
    %173 = vmatprep.subr.mxu0 0.0
    %174 = vmatpush1.msra.mxu0 %v155
    %175 = vmatprep.subr.mxu0 0.0
    %176 = vmatpush1.msra.mxu0 0.0
    %177 = vmatprep.subr.mxu0 0.0
    %178 = vmatpush1.msra.mxu0 0.0
    %179 = vmatprep.subr.mxu0 0.0
    %180 = vmatpush1.msra.mxu0 0.0
    %181 = vmatprep.subr.mxu0 0.0
    %182 = vmatpush1.msra.mxu0 0.0
    %183 = vmatprep.subr.mxu0 0.0
    %184 = vmatpush1.msra.mxu0 0.0
    %185 = vmatprep.subr.mxu0 0.0
    %186 = vmatpush1.msra.mxu0 0.0
    %187 = vmatprep.subr.mxu0 0.0
    %188 = vmatpush1.msra.mxu0 0.0
    %189 = vmatprep.subr.mxu0 0.0
    %190 = vmatpush1.msra.mxu0 0.0
    %191 = vmatprep.subr.mxu0 0.0
    %192 = vmatpush1.msra.mxu0 0.0
    %193 = vmatprep.subr.mxu0 0.0
    %194 = vmatpush1.msra.mxu0 0.0
    %195 = vmatprep.subr.mxu0 0.0
    %196 = vmatpush1.msra.mxu0 0.0
    %197 = vmatprep.subr.mxu0 0.0
    %198 = vmatpush1.msra.mxu0 0.0
    %199 = vmatprep.subr.mxu0 0.0
    %200 = vmatpush1.msra.mxu0 0.0
    %201 = vmatprep.subr.mxu0 0.0
    %202 = vmatpush1.msra.mxu0 0.0
    %203 = vmatprep.subr.mxu0 0.0
    %204 = vmatpush1.msra.mxu0 0.0
    %205 = vmatprep.subr.mxu0 0.0
    %206 = vmatpush1.msra.mxu0 0.0
    %207 = vmatprep.subr.mxu0 0.0
    %208 = vmatpush1.msra.mxu0 0.0
    %209 = vmatprep.subr.mxu0 0.0
    %210 = vmatpush1.msra.mxu0 0.0
    %211 = vmatprep.subr.mxu0 0.0
    %212 = vmatpush1.msra.mxu0 0.0
    %213 = vmatprep.subr.mxu0 0.0
    %214 = vmatpush1.msra.mxu0 0.0
    %215 = vmatprep.subr.mxu0 0.0
    %216 = vmatpush1.msra.mxu0 0.0
    %217 = vmatprep.subr.mxu0 0.0
    %218 = vmatpush1.msra.mxu0 0.0
    %219 = vmatprep.subr.mxu0 0.0
    %220 = vmatpush1.msra.mxu0 0.0
    %221 = vmatprep.subr.mxu0 0.0
    %222 = vmatpush1.msra.mxu0 0.0
    %223 = vmatprep.subr.mxu0 0.0
    %224 = vmatpush1.msra.mxu0 0.0
    %225 = vmatprep.subr.mxu0 0.0
    %226 = vmatpush1.msra.mxu0 0.0
    %227 = vmatprep.subr.mxu0 0.0
    %228 = vmatpush1.msra.mxu0 0.0
    %229 = vmatprep.subr.mxu0 0.0
    %230 = vmatpush1.msra.mxu0 0.0
    %231 = vmatprep.mubr.f32.mxu0 0.0
    %232 = vmatmul.mubr.f32.gmra.mrb[0].mxu0 %v165
    %v233 = vpop.f32.mrb[0].mxu0
    %v234 = vadd.f32 %v161, %v233
    %v235 = vpop.f32.mrb[0].mxu0
    %236 = vdwg.mxu0
    %v237 = vmax.f32 %v234, 0.0
    %v238 = vld [vmem:[%s5] sm:$0x1]
    %v239 = vld [vmem:[#allocation2] sm:$0x1]
    %v241 = vlaneseq
    %v242 = vshrl.u32 %v241, 7
    %v243 = vsub.s32 0, %v242
    %v244 = vrot.slane %v238, %v243
    %v246 = vmul.f32 %v237, %v244
    %v247 = vsel %vm163, %v246, 0.0
    %248 = vadd.xlane.f32.xlu0 %v247
    %v249 = vpop.xlane.xlu0 %248
    %v251 = vlaneseq
    %v252 = vshrl.u32 %v251, 7
    %v253 = vsub.s32 0, %v252
    %v254 = vrot.slane %v239, %v253
    %v256 = vadd.f32 %v249, %v254
    %vm257 = vcmask 7168
    %258 = vst.msk [vmem:[%s7] sm:$0xff] %vm257, %v256
    // Predicated region
    $region42: #{tpu_custom_call.1} parent=1 // pred_check
      _
    $region43: #{tpu_custom_call.1} parent=1 // pred_check_branch
      %260 = sbr.rel (0) target = $region45
    $region44: #{tpu_custom_call.1} parent=1 // pred_region
      _
    $region45: #{tpu_custom_call.1} parent=1 // pred_fallthru
      _
    // Predicated region
    $region46: #{tpu_custom_call.1} parent=1 // pred_check
      _
    $region47: #{tpu_custom_call.1} parent=1 // pred_check_branch
      %262 = sbr.rel (0) target = $region49
    $region48: #{tpu_custom_call.1} parent=1 // pred_region
      _
    $region49: #{tpu_custom_call.1} parent=1 // pred_fallthru
      _
    %263 = vsyncpa [#allocation4], 1
    %264 = vsyncpa [#allocation6], 1

</llo_original>
